<compile_context>
chip_gen: v7x
topology: tpu7x:2x2x1
jax: 0.10.0
libtpu: 0.0.40
codegen_flags: <defaults>
</compile_context>

<pallas_src>
import functools

import jax
import jax.numpy as jnp
from jax.experimental import pallas as pl
from jax.experimental.pallas import tpu as pltpu


def _round_up(x, m):
    return ((x + m - 1) // m) * m


def _vmem_capacity_bytes():
    """Physical VMEM of the current chip; conservative fallback (v7x per-TC)."""
    try:
        info = pltpu.get_tpu_info()
        cap = getattr(info, "vmem_capacity_bytes", None)
        if cap:
            return int(cap)
    except Exception:
        pass
    return 64 * 1024 * 1024


def _pick_tile_rows(batch, d, itemsize, vmem_cap):
    """Pick a batch-tile height from the chip's VMEM capacity.

    Accounting per tile row:
      * 6 tiled input streams x 2 pipeline buffers at the input dtype, plus
      * ~8 full-tile f32 compute temporaries (en, ko, pos, neg_en, neg_ko, diffs)
        that won't fit the vreg file and may spill to VMEM.
    Use ~1/3 of physical VMEM for this so compiler scratch / headroom remain.
    """
    budget_bytes = vmem_cap // 3
    per_row_bytes = 12 * d * itemsize + 8 * d * 4
    tb = budget_bytes // per_row_bytes
    tb = int(max(8, min(4096, tb)))
    tb -= tb % 8
    tb = min(tb, _round_up(batch, 8))            # never taller than (row-padded) batch
    if batch > 8:
        # Keep >= 2 grid steps so a 2-TC chip (v7x) can split the parallel axis.
        tb = min(tb, _round_up(-(-batch // 2), 8))
    return max(tb, 8)


def _triplet_loss_kernel(
    en_ref, ko_ref, etok_ref, ktoe_ref, neg_en_ref, neg_ko_ref,   # VMEM (TB, D) blocks
    out_ref,                                                      # VMEM (8, 128) partial sums
    *, margin, batch, tile_rows):
    pair_eps = 1e-6     # F.pairwise_distance default eps (added to the difference)
    cos_eps = 1e-8      # F.cosine_similarity default eps

    en = en_ref[...].astype(jnp.float32)
    ko = ko_ref[...].astype(jnp.float32)
    # positive = (pos_etok + pos_ktoe) / 2
    pos = (etok_ref[...].astype(jnp.float32) + ktoe_ref[...].astype(jnp.float32)) * 0.5
    neg_en = neg_en_ref[...].astype(jnp.float32)
    neg_ko = neg_ko_ref[...].astype(jnp.float32)

    def rowsum(x):
        return jnp.sum(x, axis=-1, keepdims=True)

    # torch.pairwise_distance(p=2): ||x - y + eps||_2 along the hidden dim.
    d_ap_en = jnp.sqrt(rowsum(jnp.square(en - pos + pair_eps)))
    d_ap_ko = jnp.sqrt(rowsum(jnp.square(ko - pos + pair_eps)))
    d_an_en = jnp.sqrt(rowsum(jnp.square(en - neg_en + pair_eps)))
    d_an_ko = jnp.sqrt(rowsum(jnp.square(ko - neg_ko + pair_eps)))

    hinge_en = jnp.maximum(d_ap_en - d_an_en + margin, 0.0)
    hinge_ko = jnp.maximum(d_ap_ko - d_an_ko + margin, 0.0)

    # cosine_similarity(anchor_en, anchor_ko): dot / max(||en||*||ko||, eps)
    # == dot * rsqrt(max(ssq_en * ssq_ko, eps^2))  — one exact EUP rsqrt.
    ssq = rowsum(en * en) * rowsum(ko * ko)
    cross_sim = rowsum(en * ko) * jax.lax.rsqrt(jnp.maximum(ssq, cos_eps * cos_eps))
    reg = jnp.abs(cross_sim - 0.8)

    # Mask rows beyond the real batch (last partial tile) with a select (not a
    # multiply) so garbage/NaN block padding cannot leak into the sums.
    row_ids = (pl.program_id(0) * tile_rows
               + jax.lax.broadcasted_iota(jnp.int32, (tile_rows, 1), 0))
    valid = row_ids < batch
    zero = jnp.zeros_like(hinge_en)
    sum_en = jnp.sum(jnp.where(valid, hinge_en, zero))
    sum_ko = jnp.sum(jnp.where(valid, hinge_ko, zero))
    sum_reg = jnp.sum(jnp.where(valid, reg, zero))

    # Pack the 3 per-tile partial sums into lanes 0..2 of a lane-dense (8,128) block
    # (full unmasked vector store); the tiny final reduction happens in the wrapper.
    lane = jax.lax.broadcasted_iota(jnp.int32, (8, 128), 1)
    out_ref[...] = jnp.where(lane == 0, sum_en,
                   jnp.where(lane == 1, sum_ko,
                   jnp.where(lane == 2, sum_reg, 0.0)))


def multilingual_triplet_loss(embeddings, labels, *, key, margin=0.5, temp=0.05,
                              tile_rows=None):
    """JAX wrapper reproducing MultilingualTripletLoss.forward.

    `labels` is accepted but unused (same as the PyTorch module).
    `key` seeds the random negative-index sampling (torch.randint equivalent).
    Embeddings may be f32 or bf16; compute is done in f32 inside the kernel.
    """
    del labels, temp  # unused in the reference forward pass
    anchor_en = embeddings["English"]
    anchor_ko = embeddings["Korean"]
    pos_etok = embeddings["EtoK"]
    pos_ktoe = embeddings["KtoE"]

    batch, d = anchor_en.shape
    # torch.randint(0, batch_size, (batch_size,)) — random negatives.
    neg_idx = jax.random.randint(key, (batch,), 0, batch, dtype=jnp.int32)
    # Wrapper-side gather: one XLA take() per language replaces 2*B single-row DMAs.
    neg_en = jnp.take(anchor_en, neg_idx, axis=0)
    neg_ko = jnp.take(anchor_ko, neg_idx, axis=0)

    vmem_cap = _vmem_capacity_bytes()
    if tile_rows is None:
        tile_rows = _pick_tile_rows(batch, d, anchor_en.dtype.itemsize, vmem_cap)
    tile_rows = max(8, _round_up(int(tile_rows), 8))
    num_tiles = pl.cdiv(batch, tile_rows)
    vmem_limit = int(min((vmem_cap * 3) // 4, 100 * 1024 * 1024))

    tiled = pl.BlockSpec((tile_rows, d), lambda i: (i, 0))
    grid_spec = pltpu.PrefetchScalarGridSpec(
        num_scalar_prefetch=0,
        grid=(num_tiles,),
        in_specs=[tiled] * 6,
        out_specs=pl.BlockSpec((8, 128), lambda i: (i, 0)),
    )

    partials = pl.pallas_call(
        functools.partial(_triplet_loss_kernel, margin=float(margin),
                          batch=batch, tile_rows=tile_rows),
        out_shape=jax.ShapeDtypeStruct((num_tiles * 8, 128), jnp.float32),
        grid_spec=grid_spec,
        compiler_params=pltpu.CompilerParams(
            dimension_semantics=("parallel",),
            vmem_limit_bytes=vmem_limit,
        ),
    )(anchor_en, anchor_ko, pos_etok, pos_ktoe, neg_en, neg_ko)

    # Final (tiny) reduction and weighting in plain JAX.
    sums = partials.reshape(num_tiles, 8, 128)[:, 0, :3].sum(axis=0)   # (3,)
    inv_b = 1.0 / batch
    loss_en = sums[0] * inv_b
    loss_ko = sums[1] * inv_b
    reg_loss = sums[2] * inv_b
    return 0.7 * (loss_en + loss_ko) + 0.3 * reg_loss


if __name__ == "__main__":
    # Small but lane-dense shapes (D is a multiple of 128); B is deliberately not a
    # multiple of the tile height so the masked last-tile path is exercised.
    B, D = 20, 128
    key = jax.random.PRNGKey(0)
    k_en, k_ko, k_etok, k_ktoe, k_neg = jax.random.split(key, 5)

    embeddings = {
        "English": jax.random.normal(k_en, (B, D), dtype=jnp.float32),
        "Korean": jax.random.normal(k_ko, (B, D), dtype=jnp.float32),
        "EtoK": jax.random.normal(k_etok, (B, D), dtype=jnp.float32),
        "KtoE": jax.random.normal(k_ktoe, (B, D), dtype=jnp.float32),
    }
    labels = jnp.arange(B, dtype=jnp.int32)  # unused, like the PyTorch module

    loss = multilingual_triplet_loss(embeddings, labels, key=k_neg,
                                     margin=0.5, temp=0.05, tile_rows=8)
    jax.block_until_ready(loss)
    print("KERNEL_OK")
</pallas_src>

<mosaic_0001>
module attributes {stable_mosaic.version = 11 : i64} {
  func.func @_triplet_loss_kernel(%arg0: i32, %arg1: memref<8x128xf32, #tpu.memory_space<vmem>>, %arg2: memref<8x128xf32, #tpu.memory_space<vmem>>, %arg3: memref<8x128xf32, #tpu.memory_space<vmem>>, %arg4: memref<8x128xf32, #tpu.memory_space<vmem>>, %arg5: memref<8x128xf32, #tpu.memory_space<vmem>>, %arg6: memref<8x128xf32, #tpu.memory_space<vmem>>, %arg7: memref<8x128xf32, #tpu.memory_space<vmem>>) attributes {dimension_semantics = [#tpu.dimension_semantics<parallel>], iteration_bounds = array<i64: 3>, scalar_prefetch = 0 : i64, scratch_operands = 0 : i64, tpu.core_type = #tpu.core_type<tc>, window_params = [{transform_indices = @transform_0, window_bounds = array<i64: 8, 128>}, {transform_indices = @transform_1, window_bounds = array<i64: 8, 128>}, {transform_indices = @transform_2, window_bounds = array<i64: 8, 128>}, {transform_indices = @transform_3, window_bounds = array<i64: 8, 128>}, {transform_indices = @transform_4, window_bounds = array<i64: 8, 128>}, {transform_indices = @transform_5, window_bounds = array<i64: 8, 128>}, {transform_indices = @transform_6, window_bounds = array<i64: 8, 128>}]} {
    %c0 = arith.constant 0 : index
    %c0_0 = arith.constant 0 : index
    %0 = vector.load %arg1[%c0, %c0_0] : memref<8x128xf32, #tpu.memory_space<vmem>>, vector<8x128xf32>
    %c0_1 = arith.constant 0 : index
    %c0_2 = arith.constant 0 : index
    %1 = vector.load %arg2[%c0_1, %c0_2] : memref<8x128xf32, #tpu.memory_space<vmem>>, vector<8x128xf32>
    %c0_3 = arith.constant 0 : index
    %c0_4 = arith.constant 0 : index
    %2 = vector.load %arg3[%c0_3, %c0_4] : memref<8x128xf32, #tpu.memory_space<vmem>>, vector<8x128xf32>
    %c0_5 = arith.constant 0 : index
    %c0_6 = arith.constant 0 : index
    %3 = vector.load %arg4[%c0_5, %c0_6] : memref<8x128xf32, #tpu.memory_space<vmem>>, vector<8x128xf32>
    %4 = arith.addf %2, %3 : vector<8x128xf32>
    %cst = arith.constant 5.000000e-01 : f32
    %5 = vector.broadcast %cst : f32 to vector<8x128xf32>
    %6 = arith.mulf %4, %5 : vector<8x128xf32>
    %c0_7 = arith.constant 0 : index
    %c0_8 = arith.constant 0 : index
    %7 = vector.load %arg5[%c0_7, %c0_8] : memref<8x128xf32, #tpu.memory_space<vmem>>, vector<8x128xf32>
    %c0_9 = arith.constant 0 : index
    %c0_10 = arith.constant 0 : index
    %8 = vector.load %arg6[%c0_9, %c0_10] : memref<8x128xf32, #tpu.memory_space<vmem>>, vector<8x128xf32>
    %9 = arith.subf %0, %6 : vector<8x128xf32>
    %cst_11 = arith.constant 9.99999997E-7 : f32
    %10 = vector.broadcast %cst_11 : f32 to vector<8x128xf32>
    %11 = arith.addf %9, %10 : vector<8x128xf32>
    %12 = arith.mulf %11, %11 : vector<8x128xf32>
    %cst_12 = arith.constant dense<0.000000e+00> : vector<8xf32>
    %13 = vector.multi_reduction <add>, %12, %cst_12 [1] : vector<8x128xf32> to vector<8xf32>
    %14 = vector.shape_cast %13 : vector<8xf32> to vector<8x1xf32>
    %15 = math.sqrt %14 : vector<8x1xf32>
    %16 = arith.subf %1, %6 : vector<8x128xf32>
    %cst_13 = arith.constant 9.99999997E-7 : f32
    %17 = vector.broadcast %cst_13 : f32 to vector<8x128xf32>
    %18 = arith.addf %16, %17 : vector<8x128xf32>
    %19 = arith.mulf %18, %18 : vector<8x128xf32>
    %cst_14 = arith.constant dense<0.000000e+00> : vector<8xf32>
    %20 = vector.multi_reduction <add>, %19, %cst_14 [1] : vector<8x128xf32> to vector<8xf32>
    %21 = vector.shape_cast %20 : vector<8xf32> to vector<8x1xf32>
    %22 = math.sqrt %21 : vector<8x1xf32>
    %23 = arith.subf %0, %7 : vector<8x128xf32>
    %cst_15 = arith.constant 9.99999997E-7 : f32
    %24 = vector.broadcast %cst_15 : f32 to vector<8x128xf32>
    %25 = arith.addf %23, %24 : vector<8x128xf32>
    %26 = arith.mulf %25, %25 : vector<8x128xf32>
    %cst_16 = arith.constant dense<0.000000e+00> : vector<8xf32>
    %27 = vector.multi_reduction <add>, %26, %cst_16 [1] : vector<8x128xf32> to vector<8xf32>
    %28 = vector.shape_cast %27 : vector<8xf32> to vector<8x1xf32>
    %29 = math.sqrt %28 : vector<8x1xf32>
    %30 = arith.subf %1, %8 : vector<8x128xf32>
    %cst_17 = arith.constant 9.99999997E-7 : f32
    %31 = vector.broadcast %cst_17 : f32 to vector<8x128xf32>
    %32 = arith.addf %30, %31 : vector<8x128xf32>
    %33 = arith.mulf %32, %32 : vector<8x128xf32>
    %cst_18 = arith.constant dense<0.000000e+00> : vector<8xf32>
    %34 = vector.multi_reduction <add>, %33, %cst_18 [1] : vector<8x128xf32> to vector<8xf32>
    %35 = vector.shape_cast %34 : vector<8xf32> to vector<8x1xf32>
    %36 = math.sqrt %35 : vector<8x1xf32>
    %37 = arith.subf %15, %29 : vector<8x1xf32>
    %cst_19 = arith.constant 5.000000e-01 : f32
    %38 = vector.broadcast %cst_19 : f32 to vector<8x1xf32>
    %39 = arith.addf %37, %38 : vector<8x1xf32>
    %cst_20 = arith.constant 0.000000e+00 : f32
    %40 = vector.broadcast %cst_20 : f32 to vector<8x1xf32>
    %41 = arith.maximumf %39, %40 : vector<8x1xf32>
    %42 = arith.subf %22, %36 : vector<8x1xf32>
    %cst_21 = arith.constant 5.000000e-01 : f32
    %43 = vector.broadcast %cst_21 : f32 to vector<8x1xf32>
    %44 = arith.addf %42, %43 : vector<8x1xf32>
    %cst_22 = arith.constant 0.000000e+00 : f32
    %45 = vector.broadcast %cst_22 : f32 to vector<8x1xf32>
    %46 = arith.maximumf %44, %45 : vector<8x1xf32>
    %47 = arith.mulf %0, %0 : vector<8x128xf32>
    %cst_23 = arith.constant dense<0.000000e+00> : vector<8xf32>
    %48 = vector.multi_reduction <add>, %47, %cst_23 [1] : vector<8x128xf32> to vector<8xf32>
    %49 = vector.shape_cast %48 : vector<8xf32> to vector<8x1xf32>
    %50 = arith.mulf %1, %1 : vector<8x128xf32>
    %cst_24 = arith.constant dense<0.000000e+00> : vector<8xf32>
    %51 = vector.multi_reduction <add>, %50, %cst_24 [1] : vector<8x128xf32> to vector<8xf32>
    %52 = vector.shape_cast %51 : vector<8xf32> to vector<8x1xf32>
    %53 = arith.mulf %49, %52 : vector<8x1xf32>
    %54 = arith.mulf %0, %1 : vector<8x128xf32>
    %cst_25 = arith.constant dense<0.000000e+00> : vector<8xf32>
    %55 = vector.multi_reduction <add>, %54, %cst_25 [1] : vector<8x128xf32> to vector<8xf32>
    %56 = vector.shape_cast %55 : vector<8xf32> to vector<8x1xf32>
    %cst_26 = arith.constant 1.000000e-16 : f32
    %57 = vector.broadcast %cst_26 : f32 to vector<8x1xf32>
    %58 = arith.maximumf %53, %57 : vector<8x1xf32>
    %59 = math.rsqrt %58 : vector<8x1xf32>
    %60 = arith.mulf %56, %59 : vector<8x1xf32>
    %cst_27 = arith.constant 8.000000e-01 : f32
    %61 = vector.broadcast %cst_27 : f32 to vector<8x1xf32>
    %62 = arith.subf %60, %61 : vector<8x1xf32>
    %63 = math.absf %62 : vector<8x1xf32>
    %c8_i32 = arith.constant 8 : i32
    %64 = arith.muli %arg0, %c8_i32 : i32
    %65 = tpu.iota {dimensions = array<i32: 0>} : vector<8x1xi32>
    %66 = vector.broadcast %64 : i32 to vector<8x1xi32>
    %67 = arith.addi %66, %65 : vector<8x1xi32>
    %c20_i32 = arith.constant 20 : i32
    %68 = vector.broadcast %c20_i32 : i32 to vector<8x1xi32>
    %69 = arith.cmpi slt, %67, %68 : vector<8x1xi32>
    %cst_28 = arith.constant 0.000000e+00 : f32
    %70 = vector.broadcast %cst_28 : f32 to vector<8x1xf32>
    %71 = arith.select %69, %41, %70 : vector<8x1xi1>, vector<8x1xf32>
    %72 = vector.shape_cast %71 : vector<8x1xf32> to vector<1x8x1xf32>
    %cst_29 = arith.constant dense<0.000000e+00> : vector<1xf32>
    %73 = vector.multi_reduction <add>, %72, %cst_29 [1, 2] : vector<1x8x1xf32> to vector<1xf32>
    %74 = vector.shape_cast %73 : vector<1xf32> to vector<1x1x1xf32>
    %75 = vector.extract %74[0, 0, 0] : f32 from vector<1x1x1xf32>
    %76 = arith.select %69, %46, %70 : vector<8x1xi1>, vector<8x1xf32>
    %77 = vector.shape_cast %76 : vector<8x1xf32> to vector<1x8x1xf32>
    %cst_30 = arith.constant dense<0.000000e+00> : vector<1xf32>
    %78 = vector.multi_reduction <add>, %77, %cst_30 [1, 2] : vector<1x8x1xf32> to vector<1xf32>
    %79 = vector.shape_cast %78 : vector<1xf32> to vector<1x1x1xf32>
    %80 = vector.extract %79[0, 0, 0] : f32 from vector<1x1x1xf32>
    %81 = arith.select %69, %63, %70 : vector<8x1xi1>, vector<8x1xf32>
    %82 = vector.shape_cast %81 : vector<8x1xf32> to vector<1x8x1xf32>
    %cst_31 = arith.constant dense<0.000000e+00> : vector<1xf32>
    %83 = vector.multi_reduction <add>, %82, %cst_31 [1, 2] : vector<1x8x1xf32> to vector<1xf32>
    %84 = vector.shape_cast %83 : vector<1xf32> to vector<1x1x1xf32>
    %85 = vector.extract %84[0, 0, 0] : f32 from vector<1x1x1xf32>
    %86 = tpu.iota {dimensions = array<i32: 1>} : vector<8x128xi32>
    %c0_i32 = arith.constant 0 : i32
    %87 = vector.broadcast %c0_i32 : i32 to vector<8x128xi32>
    %88 = arith.cmpi eq, %86, %87 : vector<8x128xi32>
    %c1_i32 = arith.constant 1 : i32
    %89 = vector.broadcast %c1_i32 : i32 to vector<8x128xi32>
    %90 = arith.cmpi eq, %86, %89 : vector<8x128xi32>
    %c2_i32 = arith.constant 2 : i32
    %91 = vector.broadcast %c2_i32 : i32 to vector<8x128xi32>
    %92 = arith.cmpi eq, %86, %91 : vector<8x128xi32>
    %cst_32 = arith.constant 0.000000e+00 : f32
    %93 = vector.broadcast %85 : f32 to vector<8x128xf32>
    %94 = vector.broadcast %cst_32 : f32 to vector<8x128xf32>
    %95 = arith.select %92, %93, %94 : vector<8x128xi1>, vector<8x128xf32>
    %96 = vector.broadcast %80 : f32 to vector<8x128xf32>
    %97 = arith.select %90, %96, %95 : vector<8x128xi1>, vector<8x128xf32>
    %98 = vector.broadcast %75 : f32 to vector<8x128xf32>
    %99 = arith.select %88, %98, %97 : vector<8x128xi1>, vector<8x128xf32>
    %c0_33 = arith.constant 0 : index
    %c0_34 = arith.constant 0 : index
    %100 = vector.load %arg7[%c0_33, %c0_34] : memref<8x128xf32, #tpu.memory_space<vmem>>, vector<8x128xf32>
    tpu.vector_store %arg7[%c0_33, %c0_34], %99 {strides = array<i32>} : memref<8x128xf32, #tpu.memory_space<vmem>>, vector<8x128xf32>,
    return
  }
  func.func @transform_0(%arg0: i32) -> (i32, i32) {
    %c0_i32 = arith.constant 0 : i32
    %c0_i32_0 = arith.constant 0 : i32
    return %arg0, %c0_i32 : i32, i32
  }
  func.func @transform_1(%arg0: i32) -> (i32, i32) {
    %c0_i32 = arith.constant 0 : i32
    %c0_i32_0 = arith.constant 0 : i32
    return %arg0, %c0_i32 : i32, i32
  }
  func.func @transform_2(%arg0: i32) -> (i32, i32) {
    %c0_i32 = arith.constant 0 : i32
    %c0_i32_0 = arith.constant 0 : i32
    return %arg0, %c0_i32 : i32, i32
  }
  func.func @transform_3(%arg0: i32) -> (i32, i32) {
    %c0_i32 = arith.constant 0 : i32
    %c0_i32_0 = arith.constant 0 : i32
    return %arg0, %c0_i32 : i32, i32
  }
  func.func @transform_4(%arg0: i32) -> (i32, i32) {
    %c0_i32 = arith.constant 0 : i32
    %c0_i32_0 = arith.constant 0 : i32
    return %arg0, %c0_i32 : i32, i32
  }
  func.func @transform_5(%arg0: i32) -> (i32, i32) {
    %c0_i32 = arith.constant 0 : i32
    %c0_i32_0 = arith.constant 0 : i32
    return %arg0, %c0_i32 : i32, i32
  }
  func.func @transform_6(%arg0: i32) -> (i32, i32) {
    %c0_i32 = arith.constant 0 : i32
    %c0_i32_0 = arith.constant 0 : i32
    return %arg0, %c0_i32 : i32, i32
  }
}

</mosaic_0001>

<llo_original>
// kernel: tpu_custom_call.1
$region0: #{tpu_custom_call.1}
  #allocation0 [shape = 'u32[]', space=smem, size = 0x4, offset = 0x4, fixed_abs, tag = 'smem constant byte address 0x4 - core index']
  #allocation1 [shape = 'u32[144,128]{1,0:T(1,128)}', space=vmem, size = 0x12000, scoped, tag = 'internal scratch']
  %s0 = inlined_call_operand.hbm [shape: f32[20,128], index: 0, kind: input, shape index: {}]
  %s1 = inlined_call_operand.hbm [shape: f32[20,128], index: 1, kind: input, shape index: {}]
  %s2 = inlined_call_operand.hbm [shape: f32[20,128], index: 2, kind: input, shape index: {}]
  %s3 = inlined_call_operand.hbm [shape: f32[20,128], index: 3, kind: input, shape index: {}]
  %s4 = inlined_call_operand.hbm [shape: f32[20,128], index: 4, kind: input, shape index: {}]
  %s5 = inlined_call_operand.hbm [shape: f32[20,128], index: 5, kind: input, shape index: {}]
  %s6 = inlined_call_operand.hbm [shape: f32[24,128], index: 6, kind: output, shape index: {}]
  %s7 = sld [smem:[#allocation0]]
  $region81: #{tpu_custom_call.1} parent=0
    _
  %s9 = ssub.s32 1, %s7
  %s10 = scalar_select 0, %s9, %s7
  $region1: #{tpu_custom_call.1} parent=0
    #allocation2 [shape = 'u8[8192]{0}', space=vmem, size = 0x2000, scoped, tag = 'input window, operand 0']
    #allocation3 [shape = 's32[2]{0}', space=sflag, size = 0x8, scoped, tag = 'scoped memory for tpu_custom_call.1']
    #allocation4 [shape = 's32[2]{0}', space=sflag, size = 0x8, scoped, tag = 'scoped memory for tpu_custom_call.1']
    #allocation5 [shape = 'u8[8192]{0}', space=vmem, size = 0x2000, scoped, tag = 'input window, operand 1']
    #allocation6 [shape = 's32[2]{0}', space=sflag, size = 0x8, scoped, tag = 'scoped memory for tpu_custom_call.1']
    #allocation7 [shape = 'u8[8192]{0}', space=vmem, size = 0x2000, scoped, tag = 'input window, operand 2']
    #allocation8 [shape = 'u8[8192]{0}', space=vmem, size = 0x2000, scoped, tag = 'input window, operand 3']
    #allocation9 [shape = 's32[2]{0}', space=sflag, size = 0x8, scoped, tag = 'scoped memory for tpu_custom_call.1']
    #allocation10 [shape = 'u8[8192]{0}', space=vmem, size = 0x2000, scoped, tag = 'input window, operand 4']
    #allocation11 [shape = 'u8[8192]{0}', space=vmem, size = 0x2000, scoped, tag = 'input window, operand 5']
    #allocation12 [shape = 's32[2]{0}', space=sflag, size = 0x8, scoped, tag = 'scoped memory for tpu_custom_call.1']
    #allocation13 [shape = 'u8[8192]{0}', space=vmem, size = 0x2000, scoped, tag = 'output window, operand 0']
    %11 = vsyncpa [#allocation3], 0
    %s12 = scalar_lea.sflag [#allocation3], 1
    %13 = vsyncpa %s12, 0
    %14 = vsyncpa [#allocation6], 0
    %s15 = scalar_lea.sflag [#allocation6], 1
    %16 = vsyncpa %s15, 0
    %17 = vsyncpa [#allocation9], 0
    %s18 = scalar_lea.sflag [#allocation9], 1
    %19 = vsyncpa %s18, 0
    %20 = vsyncpa [#allocation12], 0
    %s21 = scalar_lea.sflag [#allocation12], 1
    %22 = vsyncpa %s21, 0
    %23 = vsyncpa [#allocation4], 0
    %s24 = scalar_lea.sflag [#allocation4], 1
    %25 = vsyncpa %s24, 0
    loop: start=0, step=1, limit=5
    $region2: #{tpu_custom_call.1} parent=1 // loop_pre_header
      _
    $region3: #{tpu_custom_call.1} parent=1 // loop_header
      %s27 = sphi 0, %s31
      %p28 = scmp.ge.s32.totalorder %s27, 5
      %s37 = sphi 0, %s39
      %s40 = sphi 0, %s37
      %s41 = sphi 0, %s40
      %s57 = sphi 0, %s41
      %s63 = sphi 0, %s65
      %s66 = sphi 0, %s63
      %s67 = sphi 0, %s66
      %s83 = sphi 0, %s67
      %s89 = sphi 0, %s91
      %s92 = sphi 0, %s89
      %s93 = sphi 0, %s92
      %s109 = sphi 0, %s93
      %s115 = sphi 0, %s117
      %s118 = sphi 0, %s115
      %s119 = sphi 0, %s118
      %s135 = sphi 0, %s119
      %s141 = sphi 0, %s143
      %s144 = sphi 0, %s141
      %s145 = sphi 0, %s144
      %s161 = sphi 0, %s145
      %s167 = sphi 0, %s169
      %s170 = sphi 0, %s167
      %s171 = sphi 0, %s170
      %s187 = sphi 0, %s171
      %s193 = sphi 0, %s195
      %s196 = sphi 0, %s193
      %s197 = sphi 0, %s196
      %s213 = sphi 0, %s197
    $region4: #{tpu_custom_call.1} parent=1 // loop_header_branch
      %30 = sbr.rel (%p28) target = $region8
    $region5: #{tpu_custom_call.1} parent=1 // loop_body
      %s32 = ssub.s32 %s27, 1
      %s33 = ssub.s32 %s27, 2
      %s34 = sadd.s32 %s27, 1
      %s35 = ssub.s32 %s27, %s34
      %p36 = scmp.eq.s32.totalorder %s35, 0
      %s38 = sadd.s32 %s37, 1
      %s39 = scalar_select %p36, %s37, %s38
      %p42 = pneg %p36
      %p43 = scmp.eq.s32.totalorder %s27, 2
      %p44 = por %p42, %p43
      %p45 = scmp.ne.s32.totalorder %s37, %s40
      %p46 = scmp.eq.s32.totalorder %s27, 0
      %p47 = por %p45, %p46
      %p48 = scmp.ne.s32.totalorder %s37, %s40
      %p49 = scmp.eq.s32.totalorder %s32, 2
      %p50 = por %p48, %p49
      %p51 = scmp.ne.s32.totalorder %s40, %s41
      %p52 = scmp.eq.s32.totalorder %s32, 0
      %p53 = por %p51, %p52
      %p54 = scmp.ne.s32.totalorder %s40, %s41
      %p55 = scmp.eq.s32.totalorder %s33, 2
      %p56 = por %p54, %p55
      %p58 = scmp.ne.s32.totalorder %s41, %s57
      %p59 = scmp.eq.s32.totalorder %s33, 0
      %p60 = por %p58, %p59
      %s61 = ssub.s32 %s27, %s34
      %p62 = scmp.eq.s32.totalorder %s61, 0
      %s64 = sadd.s32 %s63, 1
      %s65 = scalar_select %p62, %s63, %s64
      %p68 = pneg %p62
      %p69 = scmp.eq.s32.totalorder %s27, 2
      %p70 = por %p68, %p69
      %p71 = scmp.ne.s32.totalorder %s63, %s66
      %p72 = scmp.eq.s32.totalorder %s27, 0
      %p73 = por %p71, %p72
      %p74 = scmp.ne.s32.totalorder %s63, %s66
      %p75 = scmp.eq.s32.totalorder %s32, 2
      %p76 = por %p74, %p75
      %p77 = scmp.ne.s32.totalorder %s66, %s67
      %p78 = scmp.eq.s32.totalorder %s32, 0
      %p79 = por %p77, %p78
      %p80 = scmp.ne.s32.totalorder %s66, %s67
      %p81 = scmp.eq.s32.totalorder %s33, 2
      %p82 = por %p80, %p81
      %p84 = scmp.ne.s32.totalorder %s67, %s83
      %p85 = scmp.eq.s32.totalorder %s33, 0
      %p86 = por %p84, %p85
      %s87 = ssub.s32 %s27, %s34
      %p88 = scmp.eq.s32.totalorder %s87, 0
      %s90 = sadd.s32 %s89, 1
      %s91 = scalar_select %p88, %s89, %s90
      %p94 = pneg %p88
      %p95 = scmp.eq.s32.totalorder %s27, 2
      %p96 = por %p94, %p95
      %p97 = scmp.ne.s32.totalorder %s89, %s92
      %p98 = scmp.eq.s32.totalorder %s27, 0
      %p99 = por %p97, %p98
      %p100 = scmp.ne.s32.totalorder %s89, %s92
      %p101 = scmp.eq.s32.totalorder %s32, 2
      %p102 = por %p100, %p101
      %p103 = scmp.ne.s32.totalorder %s92, %s93
      %p104 = scmp.eq.s32.totalorder %s32, 0
      %p105 = por %p103, %p104
      %p106 = scmp.ne.s32.totalorder %s92, %s93
      %p107 = scmp.eq.s32.totalorder %s33, 2
      %p108 = por %p106, %p107
      %p110 = scmp.ne.s32.totalorder %s93, %s109
      %p111 = scmp.eq.s32.totalorder %s33, 0
      %p112 = por %p110, %p111
      %s113 = ssub.s32 %s27, %s34
      %p114 = scmp.eq.s32.totalorder %s113, 0
      %s116 = sadd.s32 %s115, 1
      %s117 = scalar_select %p114, %s115, %s116
      %p120 = pneg %p114
      %p121 = scmp.eq.s32.totalorder %s27, 2
      %p122 = por %p120, %p121
      %p123 = scmp.ne.s32.totalorder %s115, %s118
      %p124 = scmp.eq.s32.totalorder %s27, 0
      %p125 = por %p123, %p124
      %p126 = scmp.ne.s32.totalorder %s115, %s118
      %p127 = scmp.eq.s32.totalorder %s32, 2
      %p128 = por %p126, %p127
      %p129 = scmp.ne.s32.totalorder %s118, %s119
      %p130 = scmp.eq.s32.totalorder %s32, 0
      %p131 = por %p129, %p130
      %p132 = scmp.ne.s32.totalorder %s118, %s119
      %p133 = scmp.eq.s32.totalorder %s33, 2
      %p134 = por %p132, %p133
      %p136 = scmp.ne.s32.totalorder %s119, %s135
      %p137 = scmp.eq.s32.totalorder %s33, 0
      %p138 = por %p136, %p137
      %s139 = ssub.s32 %s27, %s34
      %p140 = scmp.eq.s32.totalorder %s139, 0
      %s142 = sadd.s32 %s141, 1
      %s143 = scalar_select %p140, %s141, %s142
      %p146 = pneg %p140
      %p147 = scmp.eq.s32.totalorder %s27, 2
      %p148 = por %p146, %p147
      %p149 = scmp.ne.s32.totalorder %s141, %s144
      %p150 = scmp.eq.s32.totalorder %s27, 0
      %p151 = por %p149, %p150
      %p152 = scmp.ne.s32.totalorder %s141, %s144
      %p153 = scmp.eq.s32.totalorder %s32, 2
      %p154 = por %p152, %p153
      %p155 = scmp.ne.s32.totalorder %s144, %s145
      %p156 = scmp.eq.s32.totalorder %s32, 0
      %p157 = por %p155, %p156
      %p158 = scmp.ne.s32.totalorder %s144, %s145
      %p159 = scmp.eq.s32.totalorder %s33, 2
      %p160 = por %p158, %p159
      %p162 = scmp.ne.s32.totalorder %s145, %s161
      %p163 = scmp.eq.s32.totalorder %s33, 0
      %p164 = por %p162, %p163
      %s165 = ssub.s32 %s27, %s34
      %p166 = scmp.eq.s32.totalorder %s165, 0
      %s168 = sadd.s32 %s167, 1
      %s169 = scalar_select %p166, %s167, %s168
      %p172 = pneg %p166
      %p173 = scmp.eq.s32.totalorder %s27, 2
      %p174 = por %p172, %p173
      %p175 = scmp.ne.s32.totalorder %s167, %s170
      %p176 = scmp.eq.s32.totalorder %s27, 0
      %p177 = por %p175, %p176
      %p178 = scmp.ne.s32.totalorder %s167, %s170
      %p179 = scmp.eq.s32.totalorder %s32, 2
      %p180 = por %p178, %p179
      %p181 = scmp.ne.s32.totalorder %s170, %s171
      %p182 = scmp.eq.s32.totalorder %s32, 0
      %p183 = por %p181, %p182
      %p184 = scmp.ne.s32.totalorder %s170, %s171
      %p185 = scmp.eq.s32.totalorder %s33, 2
      %p186 = por %p184, %p185
      %p188 = scmp.ne.s32.totalorder %s171, %s187
      %p189 = scmp.eq.s32.totalorder %s33, 0
      %p190 = por %p188, %p189
      %s191 = ssub.s32 %s27, %s34
      %p192 = scmp.eq.s32.totalorder %s191, 0
      %s194 = sadd.s32 %s193, 1
      %s195 = scalar_select %p192, %s193, %s194
      %p198 = pneg %p192
      %p199 = scmp.eq.s32.totalorder %s27, 2
      %p200 = por %p198, %p199
      %p201 = scmp.ne.s32.totalorder %s193, %s196
      %p202 = scmp.eq.s32.totalorder %s27, 0
      %p203 = por %p201, %p202
      %p204 = scmp.ne.s32.totalorder %s193, %s196
      %p205 = scmp.eq.s32.totalorder %s32, 2
      %p206 = por %p204, %p205
      %p207 = scmp.ne.s32.totalorder %s196, %s197
      %p208 = scmp.eq.s32.totalorder %s32, 0
      %p209 = por %p207, %p208
      %p210 = scmp.ne.s32.totalorder %s196, %s197
      %p211 = scmp.eq.s32.totalorder %s33, 2
      %p212 = por %p210, %p211
      %p214 = scmp.ne.s32.totalorder %s197, %s213
      %p215 = scmp.eq.s32.totalorder %s33, 0
      %p216 = por %p214, %p215
      %p217 = scmp.le.s32.totalorder 1, %s27
      %p218 = scmp.lt.s32.totalorder %s27, 4
      %p219 = pnand %p217, %p218
      %p220 = pneg %p219
      // Predicated region
      $region9: #{tpu_custom_call.1} parent=5 // pred_check
        _
      $region10: #{tpu_custom_call.1} parent=5 // pred_check_branch
        %222 = sbr.rel (%p219) target = $region12
      $region11: #{tpu_custom_call.1} parent=5 // pred_region
        %s223 = ssub.s32 %s27, 1
      $region12: #{tpu_custom_call.1} parent=5 // pred_fallthru
        _
      %p224 = scmp.lt.s32.totalorder %s27, 3
      // Predicated region
      $region13: #{tpu_custom_call.1} parent=5 // pred_check
        %p225 = pneg %p224
      $region14: #{tpu_custom_call.1} parent=5 // pred_check_branch
        %227 = sbr.rel (%p225) target = $region16
      $region15: #{tpu_custom_call.1} parent=5 // pred_region
        // Predicated region
        $region17: #{tpu_custom_call.1} parent=15 // pred_check
          %p228 = pneg %p47
        $region18: #{tpu_custom_call.1} parent=15 // pred_check_branch
          %230 = sbr.rel (%p228) target = $region20
        $region19: #{tpu_custom_call.1} parent=15 // pred_region
          %s231 = sand.u32 %s37, 1
          %s232 = scalar_lea.sflag [#allocation3], %s231
          %s233 = sand.u32 %s37, 1
          %s234 = smul.addr %s233, 8
          %s235 = scalar_lea.vmem [#allocation2], %s234
          %s237 = ssub.s32 128, 128
          %238 = vsyncadd %s232, %s237
          %s239 = smul.addr %s27, 128
          %s240 = scalar_lea.hbm %s0, %s239
          %s242 = sshll.u32 %s235, 4
          %s243 = int_to_ptr.vmem [resolvable:$true] %s242
          %245 = dma.hbm_to_vmem [thread:$0]  %s240, 128, %s243, %s232
        $region20: #{tpu_custom_call.1} parent=15 // pred_fallthru
          _
        // Predicated region
        $region21: #{tpu_custom_call.1} parent=15 // pred_check
          %p246 = pneg %p73
        $region22: #{tpu_custom_call.1} parent=15 // pred_check_branch
          %248 = sbr.rel (%p246) target = $region24
        $region23: #{tpu_custom_call.1} parent=15 // pred_region
          %s249 = sand.u32 %s27, 1
          %s250 = scalar_lea.sflag [#allocation6], %s249
          %s251 = sand.u32 %s63, 1
          %s252 = smul.addr %s251, 8
          %s253 = scalar_lea.vmem [#allocation5], %s252
          %s255 = ssub.s32 128, 128
          %256 = vsyncadd %s250, %s255
          %s257 = smul.addr %s27, 128
          %s258 = scalar_lea.hbm %s1, %s257
          %s260 = sshll.u32 %s253, 4
          %s261 = int_to_ptr.vmem [resolvable:$true] %s260
          %263 = dma.hbm_to_vmem [thread:$0]  %s258, 128, %s261, %s250
        $region24: #{tpu_custom_call.1} parent=15 // pred_fallthru
          _
        // Predicated region
        $region25: #{tpu_custom_call.1} parent=15 // pred_check
          %p264 = pneg %p99
        $region26: #{tpu_custom_call.1} parent=15 // pred_check_branch
          %266 = sbr.rel (%p264) target = $region28
        $region27: #{tpu_custom_call.1} parent=15 // pred_region
          %s267 = sand.u32 %s27, 1
          %s268 = scalar_lea.sflag [#allocation6], %s267
          %s269 = sand.u32 %s89, 1
          %s270 = smul.addr %s269, 8
          %s271 = scalar_lea.vmem [#allocation7], %s270
          %s273 = ssub.s32 128, 128
          %274 = vsyncadd %s268, %s273
          %s275 = smul.addr %s27, 128
          %s276 = scalar_lea.hbm %s2, %s275
          %s278 = sshll.u32 %s271, 4
          %s279 = int_to_ptr.vmem [resolvable:$true] %s278
          %281 = dma.hbm_to_vmem [thread:$0]  %s276, 128, %s279, %s268
        $region28: #{tpu_custom_call.1} parent=15 // pred_fallthru
          _
        // Predicated region
        $region29: #{tpu_custom_call.1} parent=15 // pred_check
          %p282 = pneg %p125
        $region30: #{tpu_custom_call.1} parent=15 // pred_check_branch
          %284 = sbr.rel (%p282) target = $region32
        $region31: #{tpu_custom_call.1} parent=15 // pred_region
          %s285 = sand.u32 %s27, 1
          %s286 = scalar_lea.sflag [#allocation9], %s285
          %s287 = sand.u32 %s115, 1
          %s288 = smul.addr %s287, 8
          %s289 = scalar_lea.vmem [#allocation8], %s288
          %s291 = ssub.s32 128, 128
          %292 = vsyncadd %s286, %s291
          %s293 = smul.addr %s27, 128
          %s294 = scalar_lea.hbm %s3, %s293
          %s296 = sshll.u32 %s289, 4
          %s297 = int_to_ptr.vmem [resolvable:$true] %s296
          %299 = dma.hbm_to_vmem [thread:$0]  %s294, 128, %s297, %s286
        $region32: #{tpu_custom_call.1} parent=15 // pred_fallthru
          _
        // Predicated region
        $region33: #{tpu_custom_call.1} parent=15 // pred_check
          %p300 = pneg %p151
        $region34: #{tpu_custom_call.1} parent=15 // pred_check_branch
          %302 = sbr.rel (%p300) target = $region36
        $region35: #{tpu_custom_call.1} parent=15 // pred_region
          %s303 = sand.u32 %s27, 1
          %s304 = scalar_lea.sflag [#allocation9], %s303
          %s305 = sand.u32 %s141, 1
          %s306 = smul.addr %s305, 8
          %s307 = scalar_lea.vmem [#allocation10], %s306
          %s309 = ssub.s32 128, 128
          %310 = vsyncadd %s304, %s309
          %s311 = smul.addr %s27, 128
          %s312 = scalar_lea.hbm %s4, %s311
          %s314 = sshll.u32 %s307, 4
          %s315 = int_to_ptr.vmem [resolvable:$true] %s314
          %317 = dma.hbm_to_vmem [thread:$0]  %s312, 128, %s315, %s304
        $region36: #{tpu_custom_call.1} parent=15 // pred_fallthru
          _
        // Predicated region
        $region37: #{tpu_custom_call.1} parent=15 // pred_check
          %p318 = pneg %p177
        $region38: #{tpu_custom_call.1} parent=15 // pred_check_branch
          %320 = sbr.rel (%p318) target = $region40
        $region39: #{tpu_custom_call.1} parent=15 // pred_region
          %s321 = sand.u32 %s167, 1
          %s322 = scalar_lea.sflag [#allocation12], %s321
          %s323 = sand.u32 %s167, 1
          %s324 = smul.addr %s323, 8
          %s325 = scalar_lea.vmem [#allocation11], %s324
          %s327 = ssub.s32 128, 128
          %328 = vsyncadd %s322, %s327
          %s329 = smul.addr %s27, 128
          %s330 = scalar_lea.hbm %s5, %s329
          %s332 = sshll.u32 %s325, 4
          %s333 = int_to_ptr.vmem [resolvable:$true] %s332
          %335 = dma.hbm_to_vmem [thread:$0]  %s330, 128, %s333, %s322
        $region40: #{tpu_custom_call.1} parent=15 // pred_fallthru
          _
      $region16: #{tpu_custom_call.1} parent=5 // pred_fallthru
        _
      %p336 = scmp.le.s32.totalorder 1, %s27
      %p337 = scmp.lt.s32.totalorder %s27, 4
      %p338 = pnand %p336, %p337
      %p339 = pneg %p338
      // Predicated region
      $region41: #{tpu_custom_call.1} parent=5 // pred_check
        _
      $region42: #{tpu_custom_call.1} parent=5 // pred_check_branch
        %341 = sbr.rel (%p338) target = $region44
      $region43: #{tpu_custom_call.1} parent=5 // pred_region
        %s342 = ssub.s32 %s27, 1
        %s343 = sand.u32 %s40, 1
        %s344 = scalar_lea.sflag [#allocation3], %s343
        %s345 = sand.u32 %s40, 1
        %s346 = smul.addr %s345, 8
        %s347 = scalar_lea.vmem [#allocation2], %s346
        // Predicated region
        $region45: #{tpu_custom_call.1} parent=43 // pred_check
          %p348 = pneg %p53
        $region46: #{tpu_custom_call.1} parent=43 // pred_check_branch
          %350 = sbr.rel (%p348) target = $region48
        $region47: #{tpu_custom_call.1} parent=43 // pred_region
          %351 = dma.done %s344, 128
        $region48: #{tpu_custom_call.1} parent=43 // pred_fallthru
          _
        %s352 = sand.u32 %s32, 1
        %s353 = scalar_lea.sflag [#allocation6], %s352
        %s354 = sand.u32 %s66, 1
        %s355 = smul.addr %s354, 8
        %s356 = scalar_lea.vmem [#allocation5], %s355
        // Predicated region
        $region49: #{tpu_custom_call.1} parent=43 // pred_check
          %p357 = pneg %p79
        $region50: #{tpu_custom_call.1} parent=43 // pred_check_branch
          %359 = sbr.rel (%p357) target = $region52
        $region51: #{tpu_custom_call.1} parent=43 // pred_region
          %360 = dma.done %s353, 128
        $region52: #{tpu_custom_call.1} parent=43 // pred_fallthru
          _
        %s361 = sand.u32 %s32, 1
        %s362 = scalar_lea.sflag [#allocation6], %s361
        %s363 = sand.u32 %s92, 1
        %s364 = smul.addr %s363, 8
        %s365 = scalar_lea.vmem [#allocation7], %s364
        // Predicated region
        $region53: #{tpu_custom_call.1} parent=43 // pred_check
          %p366 = pneg %p105
        $region54: #{tpu_custom_call.1} parent=43 // pred_check_branch
          %368 = sbr.rel (%p366) target = $region56
        $region55: #{tpu_custom_call.1} parent=43 // pred_region
          %369 = dma.done %s362, 128
        $region56: #{tpu_custom_call.1} parent=43 // pred_fallthru
          _
        %s370 = sand.u32 %s32, 1
        %s371 = scalar_lea.sflag [#allocation9], %s370
        %s372 = sand.u32 %s118, 1
        %s373 = smul.addr %s372, 8
        %s374 = scalar_lea.vmem [#allocation8], %s373
        // Predicated region
        $region57: #{tpu_custom_call.1} parent=43 // pred_check
          %p375 = pneg %p131
        $region58: #{tpu_custom_call.1} parent=43 // pred_check_branch
          %377 = sbr.rel (%p375) target = $region60
        $region59: #{tpu_custom_call.1} parent=43 // pred_region
          %378 = dma.done %s371, 128
        $region60: #{tpu_custom_call.1} parent=43 // pred_fallthru
          _
        %s379 = sand.u32 %s32, 1
        %s380 = scalar_lea.sflag [#allocation9], %s379
        %s381 = sand.u32 %s144, 1
        %s382 = smul.addr %s381, 8
        %s383 = scalar_lea.vmem [#allocation10], %s382
        // Predicated region
        $region61: #{tpu_custom_call.1} parent=43 // pred_check
          %p384 = pneg %p157
        $region62: #{tpu_custom_call.1} parent=43 // pred_check_branch
          %386 = sbr.rel (%p384) target = $region64
        $region63: #{tpu_custom_call.1} parent=43 // pred_region
          %387 = dma.done %s380, 128
        $region64: #{tpu_custom_call.1} parent=43 // pred_fallthru
          _
        %s388 = sand.u32 %s170, 1
        %s389 = scalar_lea.sflag [#allocation12], %s388
        %s390 = sand.u32 %s170, 1
        %s391 = smul.addr %s390, 8
        %s392 = scalar_lea.vmem [#allocation11], %s391
        // Predicated region
        $region65: #{tpu_custom_call.1} parent=43 // pred_check
          %p393 = pneg %p183
        $region66: #{tpu_custom_call.1} parent=43 // pred_check_branch
          %395 = sbr.rel (%p393) target = $region68
        $region67: #{tpu_custom_call.1} parent=43 // pred_region
          %396 = dma.done %s389, 128
        $region68: #{tpu_custom_call.1} parent=43 // pred_fallthru
          _
        %s397 = sand.u32 %s40, 1
        %s398 = scalar_lea.sflag [#allocation3], %s397
        %s399 = sand.u32 %s40, 1
        %s400 = smul.addr %s399, 8
        %s401 = scalar_lea.vmem [#allocation2], %s400
        %p402 = pneg %p53
        %p403 = pneg %p50
        %s404 = sand.u32 %s32, 1
        %s405 = scalar_lea.sflag [#allocation6], %s404
        %s406 = sand.u32 %s66, 1
        %s407 = smul.addr %s406, 8
        %s408 = scalar_lea.vmem [#allocation5], %s407
        %p409 = pneg %p79
        %p410 = pneg %p76
        %s411 = sand.u32 %s32, 1
        %s412 = scalar_lea.sflag [#allocation6], %s411
        %s413 = sand.u32 %s92, 1
        %s414 = smul.addr %s413, 8
        %s415 = scalar_lea.vmem [#allocation7], %s414
        %p416 = pneg %p105
        %p417 = pneg %p102
        %s418 = sand.u32 %s32, 1
        %s419 = scalar_lea.sflag [#allocation9], %s418
        %s420 = sand.u32 %s118, 1
        %s421 = smul.addr %s420, 8
        %s422 = scalar_lea.vmem [#allocation8], %s421
        %p423 = pneg %p131
        %p424 = pneg %p128
        %s425 = sand.u32 %s32, 1
        %s426 = scalar_lea.sflag [#allocation9], %s425
        %s427 = sand.u32 %s144, 1
        %s428 = smul.addr %s427, 8
        %s429 = scalar_lea.vmem [#allocation10], %s428
        %p430 = pneg %p157
        %p431 = pneg %p154
        %s432 = sand.u32 %s170, 1
        %s433 = scalar_lea.sflag [#allocation12], %s432
        %s434 = sand.u32 %s170, 1
        %s435 = smul.addr %s434, 8
        %s436 = scalar_lea.vmem [#allocation11], %s435
        %p437 = pneg %p183
        %p438 = pneg %p180
        %p439 = pneg %p209
        %p440 = pneg %p206
        %s441 = sand.u32 %s196, 1
        %s442 = scalar_lea.sflag [#allocation4], %s441
        %s443 = sand.u32 %s196, 1
        %s444 = smul.addr %s443, 8
        %s445 = scalar_lea.vmem [#allocation13], %s444
        %v446 = vld [vmem:[%s347] sm:$0xff]
        %v447 = vld [vmem:[%s356] sm:$0xff]
        %v448 = vld [vmem:[%s365] sm:$0xff]
        %v449 = vld [vmem:[%s374] sm:$0xff]
        %v450 = vadd.f32 %v448, %v449
        %v451 = vmul.f32 %v450, 0.5
        %v452 = vld [vmem:[%s383] sm:$0xff]
        %v453 = vld [vmem:[%s392] sm:$0xff]
        %v454 = vsub.f32 %v446, %v451
        %v455 = vadd.f32 %v454, 1e-06
        %v456 = vmul.f32 %v455, %v455
        %457 = vadd.xlane.f32.xlu0 %v456
        %v458 = vpop.xlane.xlu0 %457
        %v459 = vrsqrt.pop %v458
        %v460 = vmul.f32 %v458, %v459
        %vm461 = vcmp.eq.f32.partialorder %v458, inf
        %v462 = vsel %vm461, %v458, %v460
        %vm463 = vcmp.eq.f32.partialorder %v458, 0.0
        %v464 = vand.u32 %v458, 2147483648
        %v465 = vsel %vm463, %v464, %v462
        %v466 = vsub.f32 %v447, %v451
        %v467 = vadd.f32 %v466, 1e-06
        %v468 = vmul.f32 %v467, %v467
        %469 = vadd.xlane.f32.xlu0 %v468
        %v470 = vpop.xlane.xlu0 %469
        %v471 = vrsqrt.pop %v470
        %v472 = vmul.f32 %v470, %v471
        %vm473 = vcmp.eq.f32.partialorder %v470, inf
        %v474 = vsel %vm473, %v470, %v472
        %vm475 = vcmp.eq.f32.partialorder %v470, 0.0
        %v476 = vand.u32 %v470, 2147483648
        %v477 = vsel %vm475, %v476, %v474
        %v478 = vsub.f32 %v446, %v452
        %v479 = vadd.f32 %v478, 1e-06
        %v480 = vmul.f32 %v479, %v479
        %481 = vadd.xlane.f32.xlu0 %v480
        %v482 = vpop.xlane.xlu0 %481
        %v483 = vrsqrt.pop %v482
        %v484 = vmul.f32 %v482, %v483
        %vm485 = vcmp.eq.f32.partialorder %v482, inf
        %v486 = vsel %vm485, %v482, %v484
        %vm487 = vcmp.eq.f32.partialorder %v482, 0.0
        %v488 = vand.u32 %v482, 2147483648
        %v489 = vsel %vm487, %v488, %v486
        %v490 = vsub.f32 %v447, %v453
        %v491 = vadd.f32 %v490, 1e-06
        %v492 = vmul.f32 %v491, %v491
        %493 = vadd.xlane.f32.xlu0 %v492
        %v494 = vpop.xlane.xlu0 %493
        %v495 = vrsqrt.pop %v494
        %v496 = vmul.f32 %v494, %v495
        %vm497 = vcmp.eq.f32.partialorder %v494, inf
        %v498 = vsel %vm497, %v494, %v496
        %vm499 = vcmp.eq.f32.partialorder %v494, 0.0
        %v500 = vand.u32 %v494, 2147483648
        %v501 = vsel %vm499, %v500, %v498
        %v502 = vsub.f32 %v465, %v489
        %v503 = vadd.f32 %v502, 0.5
        %v504 = vmax.f32 %v503, 0.0
        %v505 = vsub.f32 %v477, %v501
        %v506 = vadd.f32 %v505, 0.5
        %v507 = vmax.f32 %v506, 0.0
        %v508 = vmul.f32 %v446, %v446
        %509 = vadd.xlane.f32.xlu0 %v508
        %v510 = vpop.xlane.xlu0 %509
        %v511 = vmul.f32 %v447, %v447
        %512 = vadd.xlane.f32.xlu0 %v511
        %v513 = vpop.xlane.xlu0 %512
        %v514 = vmul.f32 %v510, %v513
        %v515 = vmul.f32 %v446, %v447
        %516 = vadd.xlane.f32.xlu0 %v515
        %v517 = vpop.xlane.xlu0 %516
        %v518 = vmax.f32 %v514, 1e-16
        %v519 = vrsqrt.pop %v518
        %v520 = vmul.f32 %v517, %v519
        %v521 = vsub.f32 %v520, 0.8
        %v522 = vand.u32 2147483647, %v521
        %s523 = smul.u32 %s32, 8
        %v524 = vlaneseq
        %v525 = vshrl.u32 %v524, 7
        %v526 = vstv %s523
        %v527 = vadd.s32 %v526, %v525
        %vm528 = vcmp.lt.s32.totalorder %v527, 20
        %v529 = vsel %vm528, %v504, 0.0
        %vm530 = vcmask 7168
        %v531 = vsel %vm530, %v529, 0.0
        %532 = vadd.xlane.f32.xlu0 %v531
        %v533 = vpop.xlane.xlu0 %532
        %v534 = vrot.slane %v533, 4
        %v535 = vadd.f32 %v533, %v534
        %v536 = vrot.slane %v535, 2
        %v537 = vadd.f32 %v535, %v536
        %v538 = vrot.slane %v537, 1
        %v539 = vadd.f32 %v537, %v538
        %s540 = vtos %v539
        %v541 = vsel %vm528, %v507, 0.0
        %v542 = vsel %vm530, %v541, 0.0
        %543 = vadd.xlane.f32.xlu0 %v542
        %v544 = vpop.xlane.xlu0 %543
        %v545 = vrot.slane %v544, 4
        %v546 = vadd.f32 %v544, %v545
        %v547 = vrot.slane %v546, 2
        %v548 = vadd.f32 %v546, %v547
        %v549 = vrot.slane %v548, 1
        %v550 = vadd.f32 %v548, %v549
        %s551 = vtos %v550
        %v552 = vsel %vm528, %v522, 0.0
        %v553 = vsel %vm530, %v552, 0.0
        %554 = vadd.xlane.f32.xlu0 %v553
        %v555 = vpop.xlane.xlu0 %554
        %v556 = vrot.slane %v555, 4
        %v557 = vadd.f32 %v555, %v556
        %v558 = vrot.slane %v557, 2
        %v559 = vadd.f32 %v557, %v558
        %v560 = vrot.slane %v559, 1
        %v561 = vadd.f32 %v559, %v560
        %s562 = vtos %v561
        %v563 = vlaneseq
        %v564 = vand.u32 %v563, 127
        %vm565 = vcmp.eq.s32.totalorder %v564, 0
        %vm566 = vcmp.eq.s32.totalorder %v564, 1
        %vm567 = vcmp.eq.s32.totalorder %v564, 2
        %v568 = vstv %s562
        %v569 = vsel %vm567, %v568, 0.0
        %v570 = vstv %s551
        %v571 = vsel %vm566, %v570, %v569
        %v572 = vstv %s540
        %v573 = vsel %vm565, %v572, %v571
        %574 = vst [vmem:[%s445] sm:$0xff] %v573
        %s575 = sand.u32 %s196, 1
        %s576 = scalar_lea.sflag [#allocation4], %s575
        %s577 = sand.u32 %s196, 1
        %s578 = smul.addr %s577, 8
        %s579 = scalar_lea.vmem [#allocation13], %s578
        // Predicated region
        $region69: #{tpu_custom_call.1} parent=43 // pred_check
          %p580 = pneg %p206
        $region70: #{tpu_custom_call.1} parent=43 // pred_check_branch
          %582 = sbr.rel (%p580) target = $region72
        $region71: #{tpu_custom_call.1} parent=43 // pred_region
          %s584 = ssub.s32 128, 128
          %585 = vsyncadd %s576, %s584
          %s586 = smul.addr %s32, 128
          %s587 = scalar_lea.hbm %s6, %s586
          %s589 = sshll.u32 %s579, 4
          %s590 = int_to_ptr.vmem [resolvable:$true] %s589
          %592 = dma.vmem_to_hbm [thread:$0]  %s590, 128, %s587, %s576
        $region72: #{tpu_custom_call.1} parent=43 // pred_fallthru
          _
      $region44: #{tpu_custom_call.1} parent=5 // pred_fallthru
        _
      %p593 = scmp.le.s32.totalorder 2, %s27
      // Predicated region
      $region73: #{tpu_custom_call.1} parent=5 // pred_check
        %p594 = pneg %p593
      $region74: #{tpu_custom_call.1} parent=5 // pred_check_branch
        %596 = sbr.rel (%p594) target = $region76
      $region75: #{tpu_custom_call.1} parent=5 // pred_region
        %s597 = ssub.s32 %s27, 2
        // Predicated region
        $region77: #{tpu_custom_call.1} parent=75 // pred_check
          %p598 = pneg %p212
        $region78: #{tpu_custom_call.1} parent=75 // pred_check_branch
          %600 = sbr.rel (%p598) target = $region80
        $region79: #{tpu_custom_call.1} parent=75 // pred_region
          %s601 = sand.u32 %s197, 1
          %s602 = scalar_lea.sflag [#allocation4], %s601
          %s603 = sand.u32 %s197, 1
          %s604 = smul.addr %s603, 8
          %s605 = scalar_lea.vmem [#allocation13], %s604
          %606 = dma.done %s602, 128
        $region80: #{tpu_custom_call.1} parent=75 // pred_fallthru
          _
      $region76: #{tpu_custom_call.1} parent=5 // pred_fallthru
        _
    $region6: #{tpu_custom_call.1} parent=1 // loop_footer
      %s31 = sadd.s32 1, %s27
    $region7: #{tpu_custom_call.1} parent=1 // loop_footer_branch
      %26 = sbr.rel target = $region3
    $region8: #{tpu_custom_call.1} parent=1 // loop_exit
      _
    %607 = vsyncpa [#allocation3], 1
    %s608 = scalar_lea.sflag [#allocation3], 1
    %609 = vsyncpa %s608, 1
    %610 = vsyncpa [#allocation6], 1
    %s611 = scalar_lea.sflag [#allocation6], 1
    %612 = vsyncpa %s611, 1
    %613 = vsyncpa [#allocation9], 1
    %s614 = scalar_lea.sflag [#allocation9], 1
    %615 = vsyncpa %s614, 1
    %616 = vsyncpa [#allocation12], 1
    %s617 = scalar_lea.sflag [#allocation12], 1
    %618 = vsyncpa %s617, 1
    %619 = vsyncpa [#allocation4], 1
    %s620 = scalar_lea.sflag [#allocation4], 1
    %621 = vsyncpa %s620, 1

</llo_original>
